<compile_context>
chip_gen: v7x
topology: tpu7x:2x2x1
jax: 0.10.0
libtpu: 0.0.40
codegen_flags: <defaults>
</compile_context>

<pallas_src>
import jax
import jax.numpy as jnp
from jax.experimental import pallas as pl
from jax.experimental.pallas import tpu as pltpu


# --------------------------------------------------------------------------- #
# Kernels
# --------------------------------------------------------------------------- #
def _fused_kernel(visual_ref, financial_ref, w_vis_ref, w_fin_ref, b_ref, out_ref):
    """out = visual @ W_vis + financial @ W_fin + b  (1 MXU matmul + VPU FMAs)."""
    fdim = w_fin_ref.shape[0]

    # Single MXU matmul, f32 accumulation regardless of operand dtype.
    acc = jnp.dot(visual_ref[...], w_vis_ref[...],
                  preferred_element_type=jnp.float32)
    acc = acc + b_ref[...]                              # fused bias (f32)

    # Financial contribution: K == fdim (tiny, e.g. 4) -> fdim VPU broadcast
    # FMAs instead of a 4-deep MXU contraction; pure filler under the MXU.
    fin = financial_ref[...].astype(jnp.float32)        # (tb, fdim), loaded once
    w_fin = w_fin_ref[...]                              # (fdim, dim), f32
    for j in range(fdim):                               # static trip count
        acc = acc + fin[:, j:j + 1] * w_fin[j:j + 1, :]

    out_ref[...] = acc.astype(out_ref.dtype)


def _visual_only_kernel(visual_ref, wv_ref, bv_ref, out_ref):
    """`financial is None` branch: vis_temp == V-projection of visual."""
    out_ref[...] = (jnp.dot(visual_ref[...], wv_ref[...],
                            preferred_element_type=jnp.float32)
                    + bv_ref[...]).astype(out_ref.dtype)


# --------------------------------------------------------------------------- #
# One-time weight fusion (hoist out of the per-call path / cache across calls)
# --------------------------------------------------------------------------- #
def fuse_params(params, dim, compute_dtype=jnp.bfloat16):
    """Fold the two V-projections through fc.  Done at HIGHEST precision so the
    fusion itself adds no numerical error; costs ~fdim*dim^2 + dim^3 once."""
    hi = jax.lax.Precision.HIGHEST
    wv = params["wkv"][:, dim:]                    # (dim, dim)   V half
    bv = params["bkv"][dim:]
    wfv = params["wfkv"][:, dim:]                  # (fdim, dim)  V half
    bfv = params["bfkv"][dim:]
    wfc_top = params["wfc"][:dim, :]
    wfc_bot = params["wfc"][dim:, :]

    w_vis = jnp.dot(wv, wfc_top, precision=hi)     # (dim, dim)
    w_fin = jnp.dot(wfv, wfc_bot, precision=hi)    # (fdim, dim)
    b = (jnp.dot(bv, wfc_top, precision=hi)
         + jnp.dot(bfv, wfc_bot, precision=hi)
         + params["bfc"])

    return {
        "w_vis": w_vis.astype(compute_dtype),              # MXU operand
        "w_fin": w_fin.astype(jnp.float32),                # tiny, VPU FMA path
        "b": b.reshape(1, dim).astype(jnp.float32),
        # un-fused V projection for the `financial is None` branch
        "wv": wv.astype(compute_dtype),
        "bv": bv.reshape(1, dim).astype(jnp.float32),
    }


def _full_spec(shape):
    # Whole-array block with a constant block index -> stays VMEM-resident
    # across batch tiles.
    return pl.BlockSpec(shape, lambda i: (0, 0))


# --------------------------------------------------------------------------- #
# Forward wrapper
# --------------------------------------------------------------------------- #
def cross_modal_attention(visual, temporal, financial, fused, *, block_b=256):
    """Fused CrossModalAttention forward.  `fused` comes from fuse_params()."""
    del temporal  # only feeds the dead q/softmax path; cannot affect the output

    B, dim = visual.shape
    cdtype = fused["w_vis"].dtype
    witem = cdtype.itemsize
    sub = 16 if cdtype == jnp.bfloat16 else 8      # sublane granularity

    tb = min(block_b, B)
    assert B % tb == 0, "batch must be divisible by the batch tile"
    if tb < B:
        assert tb % sub == 0, f"batch tile {tb} must be a multiple of {sub}"
    grid = (B // tb,)
    # TODO(synk): on v7x (2 TCs) prefer an even number of batch tiles.

    visual_c = visual.astype(cdtype)

    if financial is None:
        vmem_est = 2 * (dim * dim * witem + dim * 4
                        + tb * dim * witem + tb * dim * 4)
        cost = pl.CostEstimate(
            flops=2 * B * dim * dim, transcendentals=0,
            bytes_accessed=(B * dim * witem + dim * dim * witem
                            + dim * 4 + B * dim * 4))
        return pl.pallas_call(
            _visual_only_kernel,
            out_shape=jax.ShapeDtypeStruct((B, dim), jnp.float32),
            grid=grid,
            in_specs=[pl.BlockSpec((tb, dim), lambda i: (i, 0)),
                      _full_spec(fused["wv"].shape),
                      _full_spec(fused["bv"].shape)],
            out_specs=pl.BlockSpec((tb, dim), lambda i: (i, 0)),
            compiler_params=pltpu.CompilerParams(
                dimension_semantics=("parallel",),
                vmem_limit_bytes=min(128 << 20, max(32 << 20, 2 * vmem_est))),
            cost_estimate=cost,
        )(visual_c, fused["wv"], fused["bv"])

    fdim = financial.shape[1]
    vmem_est = 2 * (dim * dim * witem + fdim * dim * 4 + dim * 4
                    + tb * dim * witem + tb * fdim * 4 + tb * dim * 4)
    cost = pl.CostEstimate(
        flops=2 * B * dim * (dim + fdim), transcendentals=0,
        bytes_accessed=(B * dim * witem + B * fdim * 4
                        + dim * dim * witem + fdim * dim * 4 + dim * 4
                        + B * dim * 4))
    return pl.pallas_call(
        _fused_kernel,
        out_shape=jax.ShapeDtypeStruct((B, dim), jnp.float32),
        grid=grid,
        in_specs=[
            pl.BlockSpec((tb, dim), lambda i: (i, 0)),     # visual tile
            pl.BlockSpec((tb, fdim), lambda i: (i, 0)),    # financial tile
            _full_spec(fused["w_vis"].shape),              # resident weights
            _full_spec(fused["w_fin"].shape),
            _full_spec(fused["b"].shape),
        ],
        out_specs=pl.BlockSpec((tb, dim), lambda i: (i, 0)),
        compiler_params=pltpu.CompilerParams(
            dimension_semantics=("parallel",),
            vmem_limit_bytes=min(128 << 20, max(32 << 20, 2 * vmem_est))),
        cost_estimate=cost,
    )(visual_c, financial.astype(jnp.float32),
      fused["w_vis"], fused["w_fin"], fused["b"])


# --------------------------------------------------------------------------- #
# Pure-JAX references (match the PyTorch forward, including dead paths),
# computed at HIGHEST matmul precision so they are a true-f32 ground truth.
# --------------------------------------------------------------------------- #
def _mm(a, b):
    return jnp.dot(a, b, precision=jax.lax.Precision.HIGHEST)


def reference(visual, temporal, financial, p):
    dim = p["wq"].shape[1]
    q = _mm(temporal, p["wq"]) + p["bq"]
    kv = _mm(visual, p["wkv"]) + p["bkv"]
    k, v = kv[:, :dim], kv[:, dim:]
    attn = jax.nn.softmax(jnp.sum(q * k, axis=-1, keepdims=True), axis=-1)
    vis_temp = attn * v
    qf = _mm(financial, p["wfq"]) + p["bfq"]
    kvf = _mm(financial, p["wfkv"]) + p["bfkv"]
    kf, vf = kvf[:, :dim], kvf[:, dim:]
    attn_f = jax.nn.softmax(jnp.sum(qf * kf, axis=-1, keepdims=True), axis=-1)
    fin_attn = attn_f * vf
    combined = jnp.concatenate([vis_temp, fin_attn], axis=-1)
    return _mm(combined, p["wfc"]) + p["bfc"]


def reference_no_financial(visual, temporal, p):
    dim = p["wq"].shape[1]
    q = _mm(temporal, p["wq"]) + p["bq"]
    kv = _mm(visual, p["wkv"]) + p["bkv"]
    k, v = kv[:, :dim], kv[:, dim:]
    attn = jax.nn.softmax(jnp.sum(q * k, axis=-1, keepdims=True), axis=-1)
    return attn * v


def init_params(key, dim, fdim):
    ks = jax.random.split(key, 10)
    scale = 0.05
    return {
        "wq":   scale * jax.random.normal(ks[0], (dim, dim), jnp.float32),
        "bq":   scale * jax.random.normal(ks[1], (dim,), jnp.float32),
        "wkv":  scale * jax.random.normal(ks[2], (dim, 2 * dim), jnp.float32),
        "bkv":  scale * jax.random.normal(ks[3], (2 * dim,), jnp.float32),
        "wfq":  scale * jax.random.normal(ks[4], (fdim, dim), jnp.float32),
        "bfq":  scale * jax.random.normal(ks[5], (dim,), jnp.float32),
        "wfkv": scale * jax.random.normal(ks[6], (fdim, 2 * dim), jnp.float32),
        "bfkv": scale * jax.random.normal(ks[7], (2 * dim,), jnp.float32),
        "wfc":  scale * jax.random.normal(ks[8], (2 * dim, dim), jnp.float32),
        "bfc":  scale * jax.random.normal(ks[9], (dim,), jnp.float32),
    }


if __name__ == "__main__":
    B, DIM, FDIM = 16, 128, 4

    key = jax.random.PRNGKey(0)
    k_vis, k_tmp, k_fin, k_par = jax.random.split(key, 4)

    visual = jax.random.normal(k_vis, (B, DIM), jnp.float32)
    temporal = jax.random.normal(k_tmp, (B, DIM), jnp.float32)
    financial = jax.random.normal(k_fin, (B, FDIM), jnp.float32)
    params = init_params(k_par, DIM, FDIM)

    ref = reference(visual, temporal, financial, params)
    ref_none = reference_no_financial(visual, temporal, params)

    # f32 path: two 8-row batch tiles (exercises the parallel grid axis and the
    # sublane-alignment check).  Tolerance covers possible reduced-precision
    # defaults of f32 MXU matmuls.
    fused_f32 = fuse_params(params, DIM, compute_dtype=jnp.float32)
    out_f32 = jax.block_until_ready(
        cross_modal_attention(visual, temporal, financial, fused_f32, block_b=8))
    assert out_f32.shape == (B, DIM)
    assert jnp.allclose(out_f32, ref, atol=5e-3, rtol=5e-3), "f32 path mismatch"

    # bf16 MXU path (production config from the perf review): single large tile,
    # f32 accumulation; looser tolerance for the bf16 operand cast.
    fused_bf16 = fuse_params(params, DIM, compute_dtype=jnp.bfloat16)
    out_bf16 = jax.block_until_ready(
        cross_modal_attention(visual, temporal, financial, fused_bf16, block_b=256))
    assert out_bf16.shape == (B, DIM)
    assert jnp.allclose(out_bf16, ref, atol=1e-2, rtol=1e-2), "bf16 path mismatch"

    # `financial is None` branch of the original module.
    out_none = jax.block_until_ready(
        cross_modal_attention(visual, temporal, None, fused_f32, block_b=8))
    assert out_none.shape == (B, DIM)
    assert jnp.allclose(out_none, ref_none, atol=5e-3, rtol=5e-3), "None-branch mismatch"

    print("KERNEL_OK")
</pallas_src>

<mosaic_0001>
module attributes {stable_mosaic.version = 11 : i64} {
  func.func @_fused_kernel(%arg0: i32, %arg1: memref<8x128xf32, #tpu.memory_space<vmem>>, %arg2: memref<8x4xf32, #tpu.memory_space<vmem>>, %arg3: memref<128x128xf32, #tpu.memory_space<vmem>>, %arg4: memref<4x128xf32, #tpu.memory_space<vmem>>, %arg5: memref<1x128xf32, #tpu.memory_space<vmem>>, %arg6: memref<8x128xf32, #tpu.memory_space<vmem>>) attributes {dimension_semantics = [#tpu.dimension_semantics<parallel>], iteration_bounds = array<i64: 2>, scalar_prefetch = 0 : i64, scratch_operands = 0 : i64, tpu.core_type = #tpu.core_type<tc>, window_params = [{transform_indices = @transform_0, window_bounds = array<i64: 8, 128>}, {transform_indices = @transform_1, window_bounds = array<i64: 8, 4>}, {pipeline_mode = #tpu.pipeline_mode<synchronous>, transform_indices = @transform_2, window_bounds = array<i64: 128, 128>}, {pipeline_mode = #tpu.pipeline_mode<synchronous>, transform_indices = @transform_3, window_bounds = array<i64: 4, 128>}, {pipeline_mode = #tpu.pipeline_mode<synchronous>, transform_indices = @transform_4, window_bounds = array<i64: 1, 128>}, {transform_indices = @transform_5, window_bounds = array<i64: 8, 128>}]} {
    %c0 = arith.constant 0 : index
    %c0_0 = arith.constant 0 : index
    %0 = vector.load %arg1[%c0, %c0_0] : memref<8x128xf32, #tpu.memory_space<vmem>>, vector<8x128xf32>
    %c0_1 = arith.constant 0 : index
    %c0_2 = arith.constant 0 : index
    %1 = vector.load %arg3[%c0_1, %c0_2] : memref<128x128xf32, #tpu.memory_space<vmem>>, vector<128x128xf32>
    %cst = arith.constant dense<0.000000e+00> : vector<8x128xf32>
    %2 = tpu.matmul %0, %1, %cst {dimension_numbers = #tpu.dot_dimension_numbers<[1], [0], [0], [1], [0, 0, 1, 1], [], []>} : vector<8x128xf32>, vector<128x128xf32>, vector<8x128xf32> -> vector<8x128xf32>
    %c0_3 = arith.constant 0 : index
    %c0_4 = arith.constant 0 : index
    %3 = vector.load %arg5[%c0_3, %c0_4] : memref<1x128xf32, #tpu.memory_space<vmem>>, vector<1x128xf32>
    %4 = vector.broadcast %3 : vector<1x128xf32> to vector<8x128xf32>
    %5 = arith.addf %2, %4 : vector<8x128xf32>
    %c0_5 = arith.constant 0 : index
    %c0_6 = arith.constant 0 : index
    %6 = vector.load %arg2[%c0_5, %c0_6] : memref<8x4xf32, #tpu.memory_space<vmem>>, vector<8x4xf32>
    %c0_7 = arith.constant 0 : index
    %c0_8 = arith.constant 0 : index
    %7 = vector.load %arg4[%c0_7, %c0_8] : memref<4x128xf32, #tpu.memory_space<vmem>>, vector<4x128xf32>
    %8 = vector.extract_strided_slice %6 {offsets = [0, 0], sizes = [8, 1], strides = [1, 1]} : vector<8x4xf32> to vector<8x1xf32>
    %9 = vector.extract_strided_slice %7 {offsets = [0, 0], sizes = [1, 128], strides = [1, 1]} : vector<4x128xf32> to vector<1x128xf32>
    %10 = vector.broadcast %8 : vector<8x1xf32> to vector<8x128xf32>
    %11 = vector.broadcast %9 : vector<1x128xf32> to vector<8x128xf32>
    %12 = arith.mulf %10, %11 : vector<8x128xf32>
    %13 = arith.addf %5, %12 : vector<8x128xf32>
    %14 = vector.extract_strided_slice %6 {offsets = [0, 1], sizes = [8, 1], strides = [1, 1]} : vector<8x4xf32> to vector<8x1xf32>
    %15 = vector.extract_strided_slice %7 {offsets = [1, 0], sizes = [1, 128], strides = [1, 1]} : vector<4x128xf32> to vector<1x128xf32>
    %16 = vector.broadcast %14 : vector<8x1xf32> to vector<8x128xf32>
    %17 = vector.broadcast %15 : vector<1x128xf32> to vector<8x128xf32>
    %18 = arith.mulf %16, %17 : vector<8x128xf32>
    %19 = arith.addf %13, %18 : vector<8x128xf32>
    %20 = vector.extract_strided_slice %6 {offsets = [0, 2], sizes = [8, 1], strides = [1, 1]} : vector<8x4xf32> to vector<8x1xf32>
    %21 = vector.extract_strided_slice %7 {offsets = [2, 0], sizes = [1, 128], strides = [1, 1]} : vector<4x128xf32> to vector<1x128xf32>
    %22 = vector.broadcast %20 : vector<8x1xf32> to vector<8x128xf32>
    %23 = vector.broadcast %21 : vector<1x128xf32> to vector<8x128xf32>
    %24 = arith.mulf %22, %23 : vector<8x128xf32>
    %25 = arith.addf %19, %24 : vector<8x128xf32>
    %26 = vector.extract_strided_slice %6 {offsets = [0, 3], sizes = [8, 1], strides = [1, 1]} : vector<8x4xf32> to vector<8x1xf32>
    %27 = vector.extract_strided_slice %7 {offsets = [3, 0], sizes = [1, 128], strides = [1, 1]} : vector<4x128xf32> to vector<1x128xf32>
    %28 = vector.broadcast %26 : vector<8x1xf32> to vector<8x128xf32>
    %29 = vector.broadcast %27 : vector<1x128xf32> to vector<8x128xf32>
    %30 = arith.mulf %28, %29 : vector<8x128xf32>
    %31 = arith.addf %25, %30 : vector<8x128xf32>
    %c0_9 = arith.constant 0 : index
    %c0_10 = arith.constant 0 : index
    %32 = vector.load %arg6[%c0_9, %c0_10] : memref<8x128xf32, #tpu.memory_space<vmem>>, vector<8x128xf32>
    tpu.vector_store %arg6[%c0_9, %c0_10], %31 {strides = array<i32>} : memref<8x128xf32, #tpu.memory_space<vmem>>, vector<8x128xf32>,
    return
  }
  func.func @transform_0(%arg0: i32) -> (i32, i32) {
    %c0_i32 = arith.constant 0 : i32
    %c0_i32_0 = arith.constant 0 : i32
    return %arg0, %c0_i32 : i32, i32
  }
  func.func @transform_1(%arg0: i32) -> (i32, i32) {
    %c0_i32 = arith.constant 0 : i32
    %c0_i32_0 = arith.constant 0 : i32
    return %arg0, %c0_i32 : i32, i32
  }
  func.func @transform_2(%arg0: i32) -> (i32, i32) {
    %c0_i32 = arith.constant 0 : i32
    %c0_i32_0 = arith.constant 0 : i32
    %c0_i32_1 = arith.constant 0 : i32
    return %c0_i32, %c0_i32_0 : i32, i32
  }
  func.func @transform_3(%arg0: i32) -> (i32, i32) {
    %c0_i32 = arith.constant 0 : i32
    %c0_i32_0 = arith.constant 0 : i32
    %c0_i32_1 = arith.constant 0 : i32
    return %c0_i32, %c0_i32_0 : i32, i32
  }
  func.func @transform_4(%arg0: i32) -> (i32, i32) {
    %c0_i32 = arith.constant 0 : i32
    %c0_i32_0 = arith.constant 0 : i32
    %c0_i32_1 = arith.constant 0 : i32
    return %c0_i32, %c0_i32_0 : i32, i32
  }
  func.func @transform_5(%arg0: i32) -> (i32, i32) {
    %c0_i32 = arith.constant 0 : i32
    %c0_i32_0 = arith.constant 0 : i32
    return %arg0, %c0_i32 : i32, i32
  }
}

</mosaic_0001>

<llo_original>
// kernel: tpu_custom_call.1
$region0: #{tpu_custom_call.1}
  #allocation0 [shape = 'u32[]', space=smem, size = 0x4, offset = 0x4, fixed_abs, tag = 'smem constant byte address 0x4 - core index']
  #allocation1 [shape = 'u32[144,128]{1,0:T(1,128)}', space=vmem, size = 0x12000, scoped, tag = 'internal scratch']
  %s0 = inlined_call_operand.vmem [shape: f32[16,128], index: 0, kind: input, shape index: {}]
  %s1 = inlined_call_operand.vmem [shape: f32[16,4], index: 1, kind: input, shape index: {}]
  %s2 = inlined_call_operand.hbm [shape: f32[128,128], index: 2, kind: input, shape index: {}]
  %s3 = inlined_call_operand.vmem [shape: f32[4,128], index: 3, kind: input, shape index: {}]
  %s4 = inlined_call_operand.vmem [shape: f32[1,128], index: 4, kind: input, shape index: {}]
  %s5 = inlined_call_operand.hbm [shape: f32[16,128], index: 5, kind: output, shape index: {}]
  %s6 = sld [smem:[#allocation0]]
  $region57: #{tpu_custom_call.1} parent=0
    _
  %s8 = ssub.s32 1, %s6
  %s9 = scalar_select 0, %s8, %s6
  $region1: #{tpu_custom_call.1} parent=0
    #allocation2 [shape = 'u8[65536]{0}', space=vmem, size = 0x10000, scoped, tag = 'input window, operand 2, single buffered']
    #allocation3 [shape = 's32[2]{0}', space=sflag, size = 0x8, scoped, tag = 'scoped memory for tpu_custom_call.1']
    #allocation4 [shape = 's32[2]{0}', space=sflag, size = 0x8, scoped, tag = 'scoped memory for tpu_custom_call.1']
    #allocation5 [shape = 'u8[8192]{0}', space=vmem, size = 0x2000, scoped, tag = 'output window, operand 0']
    %10 = vsyncpa [#allocation3], 0
    %11 = vsyncpa [#allocation4], 0
    %s12 = scalar_lea.sflag [#allocation4], 1
    %13 = vsyncpa %s12, 0
    loop: start=0, step=1, limit=4
    $region2: #{tpu_custom_call.1} parent=1 // loop_pre_header
      _
    $region3: #{tpu_custom_call.1} parent=1 // loop_header
      %s15 = sphi 0, %s19
      %p16 = scmp.ge.s32.totalorder %s15, 4
      %s25 = sphi 0, %s27
      %s28 = sphi 0, %s25
      %s29 = sphi 0, %s28
      %s45 = sphi 0, %s29
      %s51 = sphi 0, %s53
      %s54 = sphi 0, %s51
      %s55 = sphi 0, %s54
      %s71 = sphi 0, %s55
      %s75 = sphi 0, %s75
      %s77 = sphi 0, %s75
      %s78 = sphi 0, %s77
      %s92 = sphi 0, %s78
      %s96 = sphi 0, %s96
      %s98 = sphi 0, %s96
      %s99 = sphi 0, %s98
      %s113 = sphi 0, %s99
      %s117 = sphi 0, %s117
      %s119 = sphi 0, %s117
      %s120 = sphi 0, %s119
      %s134 = sphi 0, %s120
      %s140 = sphi 0, %s142
      %s143 = sphi 0, %s140
      %s144 = sphi 0, %s143
      %s160 = sphi 0, %s144
    $region4: #{tpu_custom_call.1} parent=1 // loop_header_branch
      %18 = sbr.rel (%p16) target = $region8
    $region5: #{tpu_custom_call.1} parent=1 // loop_body
      %s20 = ssub.s32 %s15, 1
      %s21 = ssub.s32 %s15, 2
      %s22 = sadd.s32 %s15, 1
      %s23 = ssub.s32 %s15, %s22
      %p24 = scmp.eq.s32.totalorder %s23, 0
      %s26 = sadd.s32 %s25, 1
      %s27 = scalar_select %p24, %s25, %s26
      %p30 = pneg %p24
      %p31 = scmp.eq.s32.totalorder %s15, 1
      %p32 = por %p30, %p31
      %p33 = scmp.ne.s32.totalorder %s25, %s28
      %p34 = scmp.eq.s32.totalorder %s15, 0
      %p35 = por %p33, %p34
      %p36 = scmp.ne.s32.totalorder %s25, %s28
      %p37 = scmp.eq.s32.totalorder %s20, 1
      %p38 = por %p36, %p37
      %p39 = scmp.ne.s32.totalorder %s28, %s29
      %p40 = scmp.eq.s32.totalorder %s20, 0
      %p41 = por %p39, %p40
      %p42 = scmp.ne.s32.totalorder %s28, %s29
      %p43 = scmp.eq.s32.totalorder %s21, 1
      %p44 = por %p42, %p43
      %p46 = scmp.ne.s32.totalorder %s29, %s45
      %p47 = scmp.eq.s32.totalorder %s21, 0
      %p48 = por %p46, %p47
      %s49 = ssub.s32 %s15, %s22
      %p50 = scmp.eq.s32.totalorder %s49, 0
      %s52 = sadd.s32 %s51, 1
      %s53 = scalar_select %p50, %s51, %s52
      %p56 = pneg %p50
      %p57 = scmp.eq.s32.totalorder %s15, 1
      %p58 = por %p56, %p57
      %p59 = scmp.ne.s32.totalorder %s51, %s54
      %p60 = scmp.eq.s32.totalorder %s15, 0
      %p61 = por %p59, %p60
      %p62 = scmp.ne.s32.totalorder %s51, %s54
      %p63 = scmp.eq.s32.totalorder %s20, 1
      %p64 = por %p62, %p63
      %p65 = scmp.ne.s32.totalorder %s54, %s55
      %p66 = scmp.eq.s32.totalorder %s20, 0
      %p67 = por %p65, %p66
      %p68 = scmp.ne.s32.totalorder %s54, %s55
      %p69 = scmp.eq.s32.totalorder %s21, 1
      %p70 = por %p68, %p69
      %p72 = scmp.ne.s32.totalorder %s55, %s71
      %p73 = scmp.eq.s32.totalorder %s21, 0
      %p74 = por %p72, %p73
      %s76 = sadd.s32 %s75, 1
      %p79 = scmp.eq.s32.totalorder %s15, 1
      %p80 = scmp.ne.s32.totalorder %s75, %s77
      %p81 = scmp.eq.s32.totalorder %s15, 0
      %p82 = por %p80, %p81
      %p83 = scmp.ne.s32.totalorder %s75, %s77
      %p84 = scmp.eq.s32.totalorder %s20, 1
      %p85 = por %p83, %p84
      %p86 = scmp.ne.s32.totalorder %s77, %s78
      %p87 = scmp.eq.s32.totalorder %s20, 0
      %p88 = por %p86, %p87
      %p89 = scmp.ne.s32.totalorder %s77, %s78
      %p90 = scmp.eq.s32.totalorder %s21, 1
      %p91 = por %p89, %p90
      %p93 = scmp.ne.s32.totalorder %s78, %s92
      %p94 = scmp.eq.s32.totalorder %s21, 0
      %p95 = por %p93, %p94
      %s97 = sadd.s32 %s96, 1
      %p100 = scmp.eq.s32.totalorder %s15, 1
      %p101 = scmp.ne.s32.totalorder %s96, %s98
      %p102 = scmp.eq.s32.totalorder %s15, 0
      %p103 = por %p101, %p102
      %p104 = scmp.ne.s32.totalorder %s96, %s98
      %p105 = scmp.eq.s32.totalorder %s20, 1
      %p106 = por %p104, %p105
      %p107 = scmp.ne.s32.totalorder %s98, %s99
      %p108 = scmp.eq.s32.totalorder %s20, 0
      %p109 = por %p107, %p108
      %p110 = scmp.ne.s32.totalorder %s98, %s99
      %p111 = scmp.eq.s32.totalorder %s21, 1
      %p112 = por %p110, %p111
      %p114 = scmp.ne.s32.totalorder %s99, %s113
      %p115 = scmp.eq.s32.totalorder %s21, 0
      %p116 = por %p114, %p115
      %s118 = sadd.s32 %s117, 1
      %p121 = scmp.eq.s32.totalorder %s15, 1
      %p122 = scmp.ne.s32.totalorder %s117, %s119
      %p123 = scmp.eq.s32.totalorder %s15, 0
      %p124 = por %p122, %p123
      %p125 = scmp.ne.s32.totalorder %s117, %s119
      %p126 = scmp.eq.s32.totalorder %s20, 1
      %p127 = por %p125, %p126
      %p128 = scmp.ne.s32.totalorder %s119, %s120
      %p129 = scmp.eq.s32.totalorder %s20, 0
      %p130 = por %p128, %p129
      %p131 = scmp.ne.s32.totalorder %s119, %s120
      %p132 = scmp.eq.s32.totalorder %s21, 1
      %p133 = por %p131, %p132
      %p135 = scmp.ne.s32.totalorder %s120, %s134
      %p136 = scmp.eq.s32.totalorder %s21, 0
      %p137 = por %p135, %p136
      %s138 = ssub.s32 %s15, %s22
      %p139 = scmp.eq.s32.totalorder %s138, 0
      %s141 = sadd.s32 %s140, 1
      %s142 = scalar_select %p139, %s140, %s141
      %p145 = pneg %p139
      %p146 = scmp.eq.s32.totalorder %s15, 1
      %p147 = por %p145, %p146
      %p148 = scmp.ne.s32.totalorder %s140, %s143
      %p149 = scmp.eq.s32.totalorder %s15, 0
      %p150 = por %p148, %p149
      %p151 = scmp.ne.s32.totalorder %s140, %s143
      %p152 = scmp.eq.s32.totalorder %s20, 1
      %p153 = por %p151, %p152
      %p154 = scmp.ne.s32.totalorder %s143, %s144
      %p155 = scmp.eq.s32.totalorder %s20, 0
      %p156 = por %p154, %p155
      %p157 = scmp.ne.s32.totalorder %s143, %s144
      %p158 = scmp.eq.s32.totalorder %s21, 1
      %p159 = por %p157, %p158
      %p161 = scmp.ne.s32.totalorder %s144, %s160
      %p162 = scmp.eq.s32.totalorder %s21, 0
      %p163 = por %p161, %p162
      %p164 = scmp.le.s32.totalorder 1, %s15
      %p165 = scmp.lt.s32.totalorder %s15, 3
      %p166 = pnand %p164, %p165
      %p167 = pneg %p166
      // Predicated region
      $region9: #{tpu_custom_call.1} parent=5 // pred_check
        _
      $region10: #{tpu_custom_call.1} parent=5 // pred_check_branch
        %169 = sbr.rel (%p166) target = $region12
      $region11: #{tpu_custom_call.1} parent=5 // pred_region
        %s170 = ssub.s32 %s15, 1
        // Predicated region
        $region13: #{tpu_custom_call.1} parent=11 // pred_check
          %p171 = pneg %p88
        $region14: #{tpu_custom_call.1} parent=11 // pred_check_branch
          %173 = sbr.rel (%p171) target = $region16
        $region15: #{tpu_custom_call.1} parent=11 // pred_region
          %s175 = ssub.s32 2048, 2048
          %176 = vsyncadd [#allocation3], %s175
          %s177 = sshll.u32 [#allocation2], 4
          %s178 = int_to_ptr.vmem [resolvable:$true] %s177
          %183 = dma.hbm_to_vmem [thread:$0]  %s2, 2048, %s178, [#allocation3], 128, 128, 8
        $region16: #{tpu_custom_call.1} parent=11 // pred_fallthru
          _
        // Predicated region
        $region17: #{tpu_custom_call.1} parent=11 // pred_check
          %p184 = pneg %p109
        $region18: #{tpu_custom_call.1} parent=11 // pred_check_branch
          %186 = sbr.rel (%p184) target = $region20
        $region19: #{tpu_custom_call.1} parent=11 // pred_region
          _
        $region20: #{tpu_custom_call.1} parent=11 // pred_fallthru
          _
        // Predicated region
        $region21: #{tpu_custom_call.1} parent=11 // pred_check
          %p187 = pneg %p130
        $region22: #{tpu_custom_call.1} parent=11 // pred_check_branch
          %189 = sbr.rel (%p187) target = $region24
        $region23: #{tpu_custom_call.1} parent=11 // pred_region
          _
        $region24: #{tpu_custom_call.1} parent=11 // pred_fallthru
          _
      $region12: #{tpu_custom_call.1} parent=5 // pred_fallthru
        _
      %p190 = scmp.lt.s32.totalorder %s15, 2
      // Predicated region
      $region25: #{tpu_custom_call.1} parent=5 // pred_check
        %p191 = pneg %p190
      $region26: #{tpu_custom_call.1} parent=5 // pred_check_branch
        %193 = sbr.rel (%p191) target = $region28
      $region27: #{tpu_custom_call.1} parent=5 // pred_region
        // Predicated region
        $region29: #{tpu_custom_call.1} parent=27 // pred_check
          %p194 = pneg %p35
        $region30: #{tpu_custom_call.1} parent=27 // pred_check_branch
          %196 = sbr.rel (%p194) target = $region32
        $region31: #{tpu_custom_call.1} parent=27 // pred_region
          %p197 = scmp.lt.s32.totalorder %s15, 1
          %s198 = scalar_select %p197, %s15, 1
          %s199 = smul.addr %s198, 8
          %s200 = scalar_lea.vmem %s0, %s199
        $region32: #{tpu_custom_call.1} parent=27 // pred_fallthru
          _
        // Predicated region
        $region33: #{tpu_custom_call.1} parent=27 // pred_check
          %p201 = pneg %p61
        $region34: #{tpu_custom_call.1} parent=27 // pred_check_branch
          %203 = sbr.rel (%p201) target = $region36
        $region35: #{tpu_custom_call.1} parent=27 // pred_region
          %p204 = scmp.lt.s32.totalorder %s15, 1
          %s205 = scalar_select %p204, %s15, 1
          %s206 = smul.addr %s205, 8
          %s207 = scalar_lea.vmem %s1, %s206
        $region36: #{tpu_custom_call.1} parent=27 // pred_fallthru
          _
      $region28: #{tpu_custom_call.1} parent=5 // pred_fallthru
        _
      %p208 = scmp.le.s32.totalorder 1, %s15
      %p209 = scmp.lt.s32.totalorder %s15, 3
      %p210 = pnand %p208, %p209
      %p211 = pneg %p210
      // Predicated region
      $region37: #{tpu_custom_call.1} parent=5 // pred_check
        _
      $region38: #{tpu_custom_call.1} parent=5 // pred_check_branch
        %213 = sbr.rel (%p210) target = $region40
      $region39: #{tpu_custom_call.1} parent=5 // pred_region
        %s214 = ssub.s32 %s15, 1
        // Predicated region
        $region41: #{tpu_custom_call.1} parent=39 // pred_check
          %p215 = pneg %p88
        $region42: #{tpu_custom_call.1} parent=39 // pred_check_branch
          %217 = sbr.rel (%p215) target = $region44
        $region43: #{tpu_custom_call.1} parent=39 // pred_region
          %218 = dma.done [#allocation3], 2048
        $region44: #{tpu_custom_call.1} parent=39 // pred_fallthru
          _
        %p219 = scmp.lt.s32.totalorder %s20, 1
        %s220 = scalar_select %p219, %s20, 1
        %s221 = smul.addr %s220, 8
        %s222 = scalar_lea.vmem %s0, %s221
        %p223 = pneg %p41
        %p224 = pneg %p38
        %p225 = scmp.lt.s32.totalorder %s20, 1
        %s226 = scalar_select %p225, %s20, 1
        %s227 = smul.addr %s226, 8
        %s228 = scalar_lea.vmem %s1, %s227
        %p229 = pneg %p67
        %p230 = pneg %p64
        %p231 = pneg %p88
        %p232 = pneg %p85
        %p233 = pneg %p109
        %p234 = pneg %p106
        %p235 = pneg %p130
        %p236 = pneg %p127
        %p237 = pneg %p156
        %p238 = pneg %p153
        %s239 = sand.u32 %s143, 1
        %s240 = scalar_lea.sflag [#allocation4], %s239
        %s241 = sand.u32 %s143, 1
        %s242 = smul.addr %s241, 8
        %s243 = scalar_lea.vmem [#allocation5], %s242
        %p244 = scmp.lt.s32.totalorder %s20, 1
        %s245 = scalar_select %p244, %s20, 1
        %s246 = smul.addr %s245, 8
        %s247 = scalar_lea.vmem %s0, %s246
        %p248 = scmp.lt.s32.totalorder %s20, 1
        %s249 = scalar_select %p248, %s20, 1
        %s250 = smul.addr %s249, 8
        %s251 = scalar_lea.vmem %s1, %s250
        %v252 = vld [vmem:[%s247] sm:$0xff]
        %v253 = vld [vmem:[#allocation2] sm:$0xff]
        %v254 = vld [vmem:[#allocation2 + $0x8] sm:$0xff]
        %v255 = vld [vmem:[#allocation2 + $0x10] sm:$0xff]
        %v256 = vld [vmem:[#allocation2 + $0x18] sm:$0xff]
        %v257 = vld [vmem:[#allocation2 + $0x20] sm:$0xff]
        %v258 = vld [vmem:[#allocation2 + $0x28] sm:$0xff]
        %v259 = vld [vmem:[#allocation2 + $0x30] sm:$0xff]
        %v260 = vld [vmem:[#allocation2 + $0x38] sm:$0xff]
        %v261 = vld [vmem:[#allocation2 + $0x40] sm:$0xff]
        %v262 = vld [vmem:[#allocation2 + $0x48] sm:$0xff]
        %v263 = vld [vmem:[#allocation2 + $0x50] sm:$0xff]
        %v264 = vld [vmem:[#allocation2 + $0x58] sm:$0xff]
        %v265 = vld [vmem:[#allocation2 + $0x60] sm:$0xff]
        %v266 = vld [vmem:[#allocation2 + $0x68] sm:$0xff]
        %v267 = vld [vmem:[#allocation2 + $0x70] sm:$0xff]
        %v268 = vld [vmem:[#allocation2 + $0x78] sm:$0xff]
        %v269 = vld [vmem:[%s4] sm:$0x1]
        %v271 = vlaneseq
        %v272 = vshrl.u32 %v271, 7
        %v273 = vsub.s32 0, %v272
        %v274 = vrot.slane %v269, %v273
        %276 = vmatprep.subr.mxu0 0.0
        %277 = vmatpush1.msra.mxu0 %v253
        %278 = vmatprep.subr.mxu0 0.0
        %279 = vmatpush1.msra.mxu0 %v254
        %280 = vmatprep.subr.mxu0 0.0
        %281 = vmatpush1.msra.mxu0 %v255
        %282 = vmatprep.subr.mxu0 0.0
        %283 = vmatpush1.msra.mxu0 %v256
        %284 = vmatprep.subr.mxu0 0.0
        %285 = vmatpush1.msra.mxu0 %v257
        %286 = vmatprep.subr.mxu0 0.0
        %287 = vmatpush1.msra.mxu0 %v258
        %288 = vmatprep.subr.mxu0 0.0
        %289 = vmatpush1.msra.mxu0 %v259
        %290 = vmatprep.subr.mxu0 0.0
        %291 = vmatpush1.msra.mxu0 %v260
        %292 = vmatprep.subr.mxu0 0.0
        %293 = vmatpush1.msra.mxu0 %v261
        %294 = vmatprep.subr.mxu0 0.0
        %295 = vmatpush1.msra.mxu0 %v262
        %296 = vmatprep.subr.mxu0 0.0
        %297 = vmatpush1.msra.mxu0 %v263
        %298 = vmatprep.subr.mxu0 0.0
        %299 = vmatpush1.msra.mxu0 %v264
        %300 = vmatprep.subr.mxu0 0.0
        %301 = vmatpush1.msra.mxu0 %v265
        %302 = vmatprep.subr.mxu0 0.0
        %303 = vmatpush1.msra.mxu0 %v266
        %304 = vmatprep.subr.mxu0 0.0
        %305 = vmatpush1.msra.mxu0 %v267
        %306 = vmatprep.subr.mxu0 0.0
        %307 = vmatpush1.msra.mxu0 %v268
        %308 = vmatprep.subr.mxu0 0.0
        %309 = vmatpush1.msra.mxu0 0.0
        %310 = vmatprep.subr.mxu0 0.0
        %311 = vmatpush1.msra.mxu0 0.0
        %312 = vmatprep.subr.mxu0 0.0
        %313 = vmatpush1.msra.mxu0 0.0
        %314 = vmatprep.subr.mxu0 0.0
        %315 = vmatpush1.msra.mxu0 0.0
        %316 = vmatprep.subr.mxu0 0.0
        %317 = vmatpush1.msra.mxu0 0.0
        %318 = vmatprep.subr.mxu0 0.0
        %319 = vmatpush1.msra.mxu0 0.0
        %320 = vmatprep.subr.mxu0 0.0
        %321 = vmatpush1.msra.mxu0 0.0
        %322 = vmatprep.subr.mxu0 0.0
        %323 = vmatpush1.msra.mxu0 0.0
        %324 = vmatprep.subr.mxu0 0.0
        %325 = vmatpush1.msra.mxu0 0.0
        %326 = vmatprep.subr.mxu0 0.0
        %327 = vmatpush1.msra.mxu0 0.0
        %328 = vmatprep.subr.mxu0 0.0
        %329 = vmatpush1.msra.mxu0 0.0
        %330 = vmatprep.subr.mxu0 0.0
        %331 = vmatpush1.msra.mxu0 0.0
        %332 = vmatprep.subr.mxu0 0.0
        %333 = vmatpush1.msra.mxu0 0.0
        %334 = vmatprep.subr.mxu0 0.0
        %335 = vmatpush1.msra.mxu0 0.0
        %336 = vmatprep.subr.mxu0 0.0
        %337 = vmatpush1.msra.mxu0 0.0
        %338 = vmatprep.subr.mxu0 0.0
        %339 = vmatpush1.msra.mxu0 0.0
        %340 = vmatprep.mubr.f32.mxu0 0.0
        %341 = vmatmul.mubr.f32.gmra.mrb[0].mxu0 %v252
        %v342 = vpop.f32.mrb[0].mxu0
        %v343 = vadd.f32 %v274, %v342
        %v344 = vpop.f32.mrb[0].mxu0
        %345 = vdwg.mxu0
        %v346 = vld [vmem:[%s251] sm:$0xff]
        %v347 = vld [vmem:[%s3] sm:$0xf]
        %349 = vset.pattern.permute.xlu0 0
        %350 = vperm.xlu0 %349, %v346
        %v351 = vpop.permute.xlu0 %350
        %v353 = vlaneseq
        %v354 = vshrl.u32 %v353, 7
        %v355 = vsub.s32 0, %v354
        %v356 = vrot.slane %v347, %v355
        %v357 = vmul.f32 %v351, %v356
        %v358 = vadd.f32 %v343, %v357
        %359 = vset.pattern.permute.xlu0 1
        %360 = vperm.xlu0 %359, %v346
        %v361 = vpop.permute.xlu0 %360
        %v363 = vlaneseq
        %v364 = vshrl.u32 %v363, 7
        %v365 = vsub.s32 1, %v364
        %v366 = vrot.slane %v347, %v365
        %v367 = vmul.f32 %v361, %v366
        %v368 = vadd.f32 %v358, %v367
        %369 = vset.pattern.permute.xlu0 2
        %370 = vperm.xlu0 %369, %v346
        %v371 = vpop.permute.xlu0 %370
        %v373 = vlaneseq
        %v374 = vshrl.u32 %v373, 7
        %v375 = vsub.s32 2, %v374
        %v376 = vrot.slane %v347, %v375
        %v377 = vmul.f32 %v371, %v376
        %v378 = vadd.f32 %v368, %v377
        %379 = vset.pattern.permute.xlu0 3
        %380 = vperm.xlu0 %379, %v346
        %v381 = vpop.permute.xlu0 %380
        %v383 = vlaneseq
        %v384 = vshrl.u32 %v383, 7
        %v385 = vsub.s32 3, %v384
        %v386 = vrot.slane %v347, %v385
        %v387 = vmul.f32 %v381, %v386
        %v388 = vadd.f32 %v378, %v387
        %389 = vst [vmem:[%s243] sm:$0xff] %v388
        %s390 = sand.u32 %s143, 1
        %s391 = scalar_lea.sflag [#allocation4], %s390
        %s392 = sand.u32 %s143, 1
        %s393 = smul.addr %s392, 8
        %s394 = scalar_lea.vmem [#allocation5], %s393
        // Predicated region
        $region45: #{tpu_custom_call.1} parent=39 // pred_check
          %p395 = pneg %p153
        $region46: #{tpu_custom_call.1} parent=39 // pred_check_branch
          %397 = sbr.rel (%p395) target = $region48
        $region47: #{tpu_custom_call.1} parent=39 // pred_region
          %s399 = ssub.s32 128, 128
          %400 = vsyncadd %s391, %s399
          %s401 = smul.addr %s20, 128
          %s402 = scalar_lea.hbm %s5, %s401
          %s404 = sshll.u32 %s394, 4
          %s405 = int_to_ptr.vmem [resolvable:$true] %s404
          %407 = dma.vmem_to_hbm [thread:$0]  %s405, 128, %s402, %s391
        $region48: #{tpu_custom_call.1} parent=39 // pred_fallthru
          _
      $region40: #{tpu_custom_call.1} parent=5 // pred_fallthru
        _
      %p408 = scmp.le.s32.totalorder 2, %s15
      // Predicated region
      $region49: #{tpu_custom_call.1} parent=5 // pred_check
        %p409 = pneg %p408
      $region50: #{tpu_custom_call.1} parent=5 // pred_check_branch
        %411 = sbr.rel (%p409) target = $region52
      $region51: #{tpu_custom_call.1} parent=5 // pred_region
        %s412 = ssub.s32 %s15, 2
        // Predicated region
        $region53: #{tpu_custom_call.1} parent=51 // pred_check
          %p413 = pneg %p159
        $region54: #{tpu_custom_call.1} parent=51 // pred_check_branch
          %415 = sbr.rel (%p413) target = $region56
        $region55: #{tpu_custom_call.1} parent=51 // pred_region
          %s416 = sand.u32 %s144, 1
          %s417 = scalar_lea.sflag [#allocation4], %s416
          %s418 = sand.u32 %s144, 1
          %s419 = smul.addr %s418, 8
          %s420 = scalar_lea.vmem [#allocation5], %s419
          %421 = dma.done %s417, 128
        $region56: #{tpu_custom_call.1} parent=51 // pred_fallthru
          _
      $region52: #{tpu_custom_call.1} parent=5 // pred_fallthru
        _
    $region6: #{tpu_custom_call.1} parent=1 // loop_footer
      %s19 = sadd.s32 1, %s15
    $region7: #{tpu_custom_call.1} parent=1 // loop_footer_branch
      %14 = sbr.rel target = $region3
    $region8: #{tpu_custom_call.1} parent=1 // loop_exit
      _
    %422 = vsyncpa [#allocation3], 1
    %s423 = scalar_lea.sflag [#allocation3], 1
    %424 = vsyncpa %s423, 1
    %425 = vsyncpa [#allocation4], 1
    %s426 = scalar_lea.sflag [#allocation4], 1
    %427 = vsyncpa %s426, 1

</llo_original>
